<compile_context>
chip_gen: v7x
topology: tpu7x:2x2x1
jax: 0.10.0
libtpu: 0.0.40
codegen_flags: <defaults>
</compile_context>

<pallas_src>
import jax
import jax.numpy as jnp
from jax.experimental import pallas as pl
from jax.experimental.pallas import tpu as pltpu

# ----------------------- config (small synthetic sizes) ----------------------
B = 2            # batch
LATENT_DIM = 32  # config.latent_dim
HIDDEN = 32      # config.decoder.hidden_size
N_MELS = 16      # config.n_mels
T_LAT = 8        # latent sequence length
UPSAMPLE = 2     # config.downsample_factor (== upsample_factor)
NUM_DEC_LAYERS = 2

T = T_LAT * UPSAMPLE          # upsampled sequence length
ROWS_LAT = B * T_LAT          # flattened latent rows      (16, mult of 8)
ROWS = UPSAMPLE * ROWS_LAT    # flattened upsampled rows   (32, mult of 8)
N_MELS_PAD = 128              # lane-dense output width


# ------------------------------- Pallas kernel --------------------------------
def mel_decoder_kernel(x_ref, m_ref,
                       wfus_ref, bfus_ref,
                       wdec_ref, bdec_ref,
                       wproj_ref, bproj_ref,
                       wout_ref, bout_ref,
                       o_ref):
    x = x_ref[...]            # (ROWS_LAT, LATENT_DIM) bf16  flattened latents
    m_lat = m_ref[...]        # (ROWS_LAT, 1)          f32   latent-res mask

    # ---- FusionLayer (pointwise, linear) at latent resolution.  Linearity
    # means it commutes exactly with repeat_interleave over time. ----
    e_lat = (jnp.dot(x, wfus_ref[...], preferred_element_type=jnp.float32)
             + bfus_ref[...])                              # (ROWS_LAT, HIDDEN)

    # ---- upsample: duplicate rows as sublane-block copies (copy-major row
    # order; the wrapper un-permutes back to interleaved time order). ----
    h = jnp.concatenate([e_lat] * UPSAMPLE, axis=0)        # (ROWS, HIDDEN) f32
    m = jnp.concatenate([m_lat] * UPSAMPLE, axis=0)        # (ROWS, 1)      f32

    # ---- decoder with skip connections (pointwise layers).  Per-layer mask
    # multiplies are deferred to the final output mask (bit-identical on the
    # valid region; padded rows are zeroed at the end). ----
    for l in range(NUM_DEC_LAYERS):
        y = jnp.tanh(jnp.dot(h.astype(jnp.bfloat16), wdec_ref[l],
                             preferred_element_type=jnp.float32)
                     + bdec_ref[l])
        h = h + y

    # ---- proj (Conv1d 1x1) ----
    p = (jnp.dot(h.astype(jnp.bfloat16), wproj_ref[...],
                 preferred_element_type=jnp.float32) + bproj_ref[...])

    # ---- out (Conv1d 1x1), weights padded to 128 lanes -> lane-dense store ----
    mel = (jnp.dot(p.astype(jnp.bfloat16), wout_ref[...],
                   preferred_element_type=jnp.float32) + bout_ref[...]) * m
    o_ref[...] = mel                                       # (ROWS, N_MELS_PAD)


# --------------------------------- wrapper ------------------------------------
def mel_spec_decoder(latents, latents_lengths, sp_emb, params):
    """latents: (B, LATENT_DIM, T_LAT)  (PyTorch NCT)
       latents_lengths: (B,) int32
       sp_emb: (B, HIDDEN)
       returns (mel_hat (B, N_MELS, T), mask (B, 1, T))  -- PyTorch layout."""
    # TODO(synk): sp_emb is unused -- with pointwise stand-in decoder layers the
    # prepended speaker token is dropped by hidden_states[..., 1:] without ever
    # affecting the returned mel, so the prepend/trim path is elided entirely.
    del sp_emb

    # Flatten (B, T_LAT) onto the sublane axis; channels on the lane axis.
    x_lat = jnp.transpose(latents, (0, 2, 1)).reshape(ROWS_LAT, LATENT_DIM)
    x_lat = x_lat.astype(jnp.bfloat16)

    # Latent-resolution mask: each latent frame's UPSAMPLE copies share it
    # (lengths are always a multiple of UPSAMPLE after scaling).
    m_lat = (jnp.arange(T_LAT)[None, :] < latents_lengths[:, None])
    m_lat = m_lat.astype(jnp.float32).reshape(ROWS_LAT, 1)

    (w_fus, b_fus, w_dec, b_dec, w_proj, b_proj, w_out, b_out) = params
    # MXU operands in bf16; biases stay f32 (added to f32 accumulators).
    w_fus_bf = w_fus.astype(jnp.bfloat16)
    w_dec_bf = w_dec.astype(jnp.bfloat16)
    w_proj_bf = w_proj.astype(jnp.bfloat16)
    # Zero-pad the output projection to 128 lanes -> lane-dense output slab.
    w_out_pad = jnp.zeros((HIDDEN, N_MELS_PAD), jnp.bfloat16)
    w_out_pad = w_out_pad.at[:, :N_MELS].set(w_out.astype(jnp.bfloat16))
    b_out_pad = jnp.zeros((1, N_MELS_PAD), jnp.float32)
    b_out_pad = b_out_pad.at[:, :N_MELS].set(b_out)

    grid_spec = pltpu.PrefetchScalarGridSpec(
        num_scalar_prefetch=0,
        grid=(1,),                      # single step: whole problem in one tile
        in_specs=[
            pl.BlockSpec((ROWS_LAT, LATENT_DIM), lambda i: (0, 0)),       # x
            pl.BlockSpec((ROWS_LAT, 1), lambda i: (0, 0)),                # mask
            pl.BlockSpec((LATENT_DIM, HIDDEN), lambda i: (0, 0)),         # W_fus
            pl.BlockSpec((1, HIDDEN), lambda i: (0, 0)),                  # b_fus
            pl.BlockSpec((NUM_DEC_LAYERS, HIDDEN, HIDDEN),
                         lambda i: (0, 0, 0)),                            # W_dec
            pl.BlockSpec((NUM_DEC_LAYERS, 1, HIDDEN),
                         lambda i: (0, 0, 0)),                            # b_dec
            pl.BlockSpec((HIDDEN, HIDDEN), lambda i: (0, 0)),             # W_proj
            pl.BlockSpec((1, HIDDEN), lambda i: (0, 0)),                  # b_proj
            pl.BlockSpec((HIDDEN, N_MELS_PAD), lambda i: (0, 0)),         # W_out
            pl.BlockSpec((1, N_MELS_PAD), lambda i: (0, 0)),              # b_out
        ],
        out_specs=pl.BlockSpec((ROWS, N_MELS_PAD), lambda i: (0, 0)),
    )

    out = pl.pallas_call(
        mel_decoder_kernel,
        out_shape=jax.ShapeDtypeStruct((ROWS, N_MELS_PAD), jnp.float32),
        grid_spec=grid_spec,
        # NOTE(v7x): with larger B, split ROWS into row blocks and mark the
        # axis "parallel" so both TensorCores take half the batch.
        compiler_params=pltpu.CompilerParams(
            dimension_semantics=("arbitrary",)),
    )(x_lat, m_lat, w_fus_bf, b_fus, w_dec_bf, b_dec,
      w_proj_bf, b_proj, w_out_pad, b_out_pad)

    # Un-permute copy-major rows (r, b, t) back to PyTorch (B, N_MELS, T) with
    # interleaved time index u = t*UPSAMPLE + r (layout plumbing on tiny data).
    o4 = out[:, :N_MELS].reshape(UPSAMPLE, B, T_LAT, N_MELS)
    mel_hat = jnp.transpose(o4, (1, 3, 2, 0)).reshape(B, N_MELS, T)

    lengths = latents_lengths * UPSAMPLE
    mask_bt = (jnp.arange(T)[None, :] < lengths[:, None])
    mask_out = mask_bt.astype(latents_lengths.dtype)[:, None, :]   # (B, 1, T)
    return mel_hat, mask_out


# ------------------------- deterministic parameter init -----------------------
def init_params():
    key = jax.random.PRNGKey(42)
    ks = jax.random.split(key, 8)
    s = 0.1
    w_fus = s * jax.random.normal(ks[0], (LATENT_DIM, HIDDEN), jnp.float32)
    b_fus = s * jax.random.normal(ks[1], (1, HIDDEN), jnp.float32)
    w_dec = s * jax.random.normal(ks[2], (NUM_DEC_LAYERS, HIDDEN, HIDDEN), jnp.float32)
    b_dec = s * jax.random.normal(ks[3], (NUM_DEC_LAYERS, 1, HIDDEN), jnp.float32)
    w_proj = s * jax.random.normal(ks[4], (HIDDEN, HIDDEN), jnp.float32)
    b_proj = s * jax.random.normal(ks[5], (1, HIDDEN), jnp.float32)
    w_out = s * jax.random.normal(ks[6], (HIDDEN, N_MELS), jnp.float32)
    b_out = s * jax.random.normal(ks[7], (1, N_MELS), jnp.float32)
    return (w_fus, b_fus, w_dec, b_dec, w_proj, b_proj, w_out, b_out)


if __name__ == "__main__":
    key = jax.random.PRNGKey(0)
    k1, k2 = jax.random.split(key, 2)
    latents = jax.random.normal(k1, (B, LATENT_DIM, T_LAT), jnp.float32)
    latents_lengths = jnp.array([T_LAT, T_LAT - 3], dtype=jnp.int32)
    sp_emb = jax.random.normal(k2, (B, HIDDEN), jnp.float32)

    params = init_params()
    mel_hat, mask = jax.jit(mel_spec_decoder)(latents, latents_lengths, sp_emb, params)
    jax.block_until_ready((mel_hat, mask))

    assert mel_hat.shape == (B, N_MELS, T)
    assert mask.shape == (B, 1, T)
    print("KERNEL_OK")
</pallas_src>

<mosaic_0001>
module attributes {stable_mosaic.version = 11 : i64} {
  func.func @mel_decoder_kernel(%arg0: i32, %arg1: memref<16x32xbf16, #tpu.memory_space<vmem>>, %arg2: memref<16x1xf32, #tpu.memory_space<vmem>>, %arg3: memref<32x32xbf16, #tpu.memory_space<vmem>>, %arg4: memref<1x32xf32, #tpu.memory_space<vmem>>, %arg5: memref<2x32x32xbf16, #tpu.memory_space<vmem>>, %arg6: memref<2x1x32xf32, #tpu.memory_space<vmem>>, %arg7: memref<32x32xbf16, #tpu.memory_space<vmem>>, %arg8: memref<1x32xf32, #tpu.memory_space<vmem>>, %arg9: memref<32x128xbf16, #tpu.memory_space<vmem>>, %arg10: memref<1x128xf32, #tpu.memory_space<vmem>>, %arg11: memref<32x128xf32, #tpu.memory_space<vmem>>) attributes {dimension_semantics = [#tpu.dimension_semantics<arbitrary>], iteration_bounds = array<i64: 1>, scalar_prefetch = 0 : i64, scratch_operands = 0 : i64, tpu.core_type = #tpu.core_type<tc>, window_params = [{pipeline_mode = #tpu.pipeline_mode<synchronous>, transform_indices = @transform_0, window_bounds = array<i64: 16, 32>}, {pipeline_mode = #tpu.pipeline_mode<synchronous>, transform_indices = @transform_1, window_bounds = array<i64: 16, 1>}, {pipeline_mode = #tpu.pipeline_mode<synchronous>, transform_indices = @transform_2, window_bounds = array<i64: 32, 32>}, {pipeline_mode = #tpu.pipeline_mode<synchronous>, transform_indices = @transform_3, window_bounds = array<i64: 1, 32>}, {pipeline_mode = #tpu.pipeline_mode<synchronous>, transform_indices = @transform_4, window_bounds = array<i64: 2, 32, 32>}, {pipeline_mode = #tpu.pipeline_mode<synchronous>, transform_indices = @transform_5, window_bounds = array<i64: 2, 1, 32>}, {pipeline_mode = #tpu.pipeline_mode<synchronous>, transform_indices = @transform_6, window_bounds = array<i64: 32, 32>}, {pipeline_mode = #tpu.pipeline_mode<synchronous>, transform_indices = @transform_7, window_bounds = array<i64: 1, 32>}, {pipeline_mode = #tpu.pipeline_mode<synchronous>, transform_indices = @transform_8, window_bounds = array<i64: 32, 128>}, {pipeline_mode = #tpu.pipeline_mode<synchronous>, transform_indices = @transform_9, window_bounds = array<i64: 1, 128>}, {pipeline_mode = #tpu.pipeline_mode<synchronous>, transform_indices = @transform_10, window_bounds = array<i64: 32, 128>}]} {
    %c0 = arith.constant 0 : index
    %c0_0 = arith.constant 0 : index
    %0 = vector.load %arg1[%c0, %c0_0] : memref<16x32xbf16, #tpu.memory_space<vmem>>, vector<16x32xbf16>
    %c0_1 = arith.constant 0 : index
    %c0_2 = arith.constant 0 : index
    %1 = vector.load %arg2[%c0_1, %c0_2] : memref<16x1xf32, #tpu.memory_space<vmem>>, vector<16x1xf32>
    %c0_3 = arith.constant 0 : index
    %c0_4 = arith.constant 0 : index
    %2 = vector.load %arg3[%c0_3, %c0_4] : memref<32x32xbf16, #tpu.memory_space<vmem>>, vector<32x32xbf16>
    %cst = arith.constant dense<0.000000e+00> : vector<16x32xf32>
    %3 = tpu.matmul %0, %2, %cst {dimension_numbers = #tpu.dot_dimension_numbers<[1], [0], [0], [1], [0, 0, 1, 1], [], []>} : vector<16x32xbf16>, vector<32x32xbf16>, vector<16x32xf32> -> vector<16x32xf32>
    %c0_5 = arith.constant 0 : index
    %c0_6 = arith.constant 0 : index
    %4 = vector.load %arg4[%c0_5, %c0_6] : memref<1x32xf32, #tpu.memory_space<vmem>>, vector<1x32xf32>
    %5 = vector.broadcast %4 : vector<1x32xf32> to vector<16x32xf32>
    %6 = arith.addf %3, %5 : vector<16x32xf32>
    %7 = tpu.concatenate %6, %6 in 0 : vector<16x32xf32>, vector<16x32xf32> -> vector<32x32xf32>
    %8 = tpu.concatenate %1, %1 in 0 : vector<16x1xf32>, vector<16x1xf32> -> vector<32x1xf32>
    %9 = arith.truncf %7 : vector<32x32xf32> to vector<32x32xbf16>
    %c0_7 = arith.constant 0 : index
    %c0_8 = arith.constant 0 : index
    %c0_9 = arith.constant 0 : index
    %10 = vector.load %arg5[%c0_7, %c0_8, %c0_9] : memref<2x32x32xbf16, #tpu.memory_space<vmem>>, vector<1x32x32xbf16>
    %11 = vector.shape_cast %10 : vector<1x32x32xbf16> to vector<32x32xbf16>
    %cst_10 = arith.constant dense<0.000000e+00> : vector<32x32xf32>
    %12 = tpu.matmul %9, %11, %cst_10 {dimension_numbers = #tpu.dot_dimension_numbers<[1], [0], [0], [1], [0, 0, 1, 1], [], []>} : vector<32x32xbf16>, vector<32x32xbf16>, vector<32x32xf32> -> vector<32x32xf32>
    %c0_11 = arith.constant 0 : index
    %c0_12 = arith.constant 0 : index
    %c0_13 = arith.constant 0 : index
    %13 = vector.load %arg6[%c0_11, %c0_12, %c0_13] : memref<2x1x32xf32, #tpu.memory_space<vmem>>, vector<1x1x32xf32>
    %14 = vector.shape_cast %13 : vector<1x1x32xf32> to vector<1x32xf32>
    %15 = vector.broadcast %14 : vector<1x32xf32> to vector<32x32xf32>
    %16 = arith.addf %12, %15 : vector<32x32xf32>
    %17 = math.tanh %16 : vector<32x32xf32>
    %18 = arith.addf %7, %17 : vector<32x32xf32>
    %19 = arith.truncf %18 : vector<32x32xf32> to vector<32x32xbf16>
    %c1 = arith.constant 1 : index
    %c0_14 = arith.constant 0 : index
    %c0_15 = arith.constant 0 : index
    %20 = vector.load %arg5[%c1, %c0_14, %c0_15] : memref<2x32x32xbf16, #tpu.memory_space<vmem>>, vector<1x32x32xbf16>
    %21 = vector.shape_cast %20 : vector<1x32x32xbf16> to vector<32x32xbf16>
    %cst_16 = arith.constant dense<0.000000e+00> : vector<32x32xf32>
    %22 = tpu.matmul %19, %21, %cst_16 {dimension_numbers = #tpu.dot_dimension_numbers<[1], [0], [0], [1], [0, 0, 1, 1], [], []>} : vector<32x32xbf16>, vector<32x32xbf16>, vector<32x32xf32> -> vector<32x32xf32>
    %c1_17 = arith.constant 1 : index
    %c0_18 = arith.constant 0 : index
    %c0_19 = arith.constant 0 : index
    %23 = vector.load %arg6[%c1_17, %c0_18, %c0_19] : memref<2x1x32xf32, #tpu.memory_space<vmem>>, vector<1x1x32xf32>
    %24 = vector.shape_cast %23 : vector<1x1x32xf32> to vector<1x32xf32>
    %25 = vector.broadcast %24 : vector<1x32xf32> to vector<32x32xf32>
    %26 = arith.addf %22, %25 : vector<32x32xf32>
    %27 = math.tanh %26 : vector<32x32xf32>
    %28 = arith.addf %18, %27 : vector<32x32xf32>
    %29 = arith.truncf %28 : vector<32x32xf32> to vector<32x32xbf16>
    %c0_20 = arith.constant 0 : index
    %c0_21 = arith.constant 0 : index
    %30 = vector.load %arg7[%c0_20, %c0_21] : memref<32x32xbf16, #tpu.memory_space<vmem>>, vector<32x32xbf16>
    %cst_22 = arith.constant dense<0.000000e+00> : vector<32x32xf32>
    %31 = tpu.matmul %29, %30, %cst_22 {dimension_numbers = #tpu.dot_dimension_numbers<[1], [0], [0], [1], [0, 0, 1, 1], [], []>} : vector<32x32xbf16>, vector<32x32xbf16>, vector<32x32xf32> -> vector<32x32xf32>
    %c0_23 = arith.constant 0 : index
    %c0_24 = arith.constant 0 : index
    %32 = vector.load %arg8[%c0_23, %c0_24] : memref<1x32xf32, #tpu.memory_space<vmem>>, vector<1x32xf32>
    %33 = vector.broadcast %32 : vector<1x32xf32> to vector<32x32xf32>
    %34 = arith.addf %31, %33 : vector<32x32xf32>
    %35 = arith.truncf %34 : vector<32x32xf32> to vector<32x32xbf16>
    %c0_25 = arith.constant 0 : index
    %c0_26 = arith.constant 0 : index
    %36 = vector.load %arg9[%c0_25, %c0_26] : memref<32x128xbf16, #tpu.memory_space<vmem>>, vector<32x128xbf16>
    %cst_27 = arith.constant dense<0.000000e+00> : vector<32x128xf32>
    %37 = tpu.matmul %35, %36, %cst_27 {dimension_numbers = #tpu.dot_dimension_numbers<[1], [0], [0], [1], [0, 0, 1, 1], [], []>} : vector<32x32xbf16>, vector<32x128xbf16>, vector<32x128xf32> -> vector<32x128xf32>
    %c0_28 = arith.constant 0 : index
    %c0_29 = arith.constant 0 : index
    %38 = vector.load %arg10[%c0_28, %c0_29] : memref<1x128xf32, #tpu.memory_space<vmem>>, vector<1x128xf32>
    %39 = vector.broadcast %38 : vector<1x128xf32> to vector<32x128xf32>
    %40 = arith.addf %37, %39 : vector<32x128xf32>
    %41 = vector.broadcast %8 : vector<32x1xf32> to vector<32x128xf32>
    %42 = arith.mulf %40, %41 : vector<32x128xf32>
    %c0_30 = arith.constant 0 : index
    %c0_31 = arith.constant 0 : index
    %43 = vector.load %arg11[%c0_30, %c0_31] : memref<32x128xf32, #tpu.memory_space<vmem>>, vector<32x128xf32>
    tpu.vector_store %arg11[%c0_30, %c0_31], %42 {strides = array<i32>} : memref<32x128xf32, #tpu.memory_space<vmem>>, vector<32x128xf32>,
    return
  }
  func.func @transform_0(%arg0: i32) -> (i32, i32) {
    %c0_i32 = arith.constant 0 : i32
    %c0_i32_0 = arith.constant 0 : i32
    %c0_i32_1 = arith.constant 0 : i32
    return %c0_i32, %c0_i32_0 : i32, i32
  }
  func.func @transform_1(%arg0: i32) -> (i32, i32) {
    %c0_i32 = arith.constant 0 : i32
    %c0_i32_0 = arith.constant 0 : i32
    %c0_i32_1 = arith.constant 0 : i32
    return %c0_i32, %c0_i32_0 : i32, i32
  }
  func.func @transform_2(%arg0: i32) -> (i32, i32) {
    %c0_i32 = arith.constant 0 : i32
    %c0_i32_0 = arith.constant 0 : i32
    %c0_i32_1 = arith.constant 0 : i32
    return %c0_i32, %c0_i32_0 : i32, i32
  }
  func.func @transform_3(%arg0: i32) -> (i32, i32) {
    %c0_i32 = arith.constant 0 : i32
    %c0_i32_0 = arith.constant 0 : i32
    %c0_i32_1 = arith.constant 0 : i32
    return %c0_i32, %c0_i32_0 : i32, i32
  }
  func.func @transform_4(%arg0: i32) -> (i32, i32, i32) {
    %c0_i32 = arith.constant 0 : i32
    %c0_i32_0 = arith.constant 0 : i32
    %c0_i32_1 = arith.constant 0 : i32
    %c0_i32_2 = arith.constant 0 : i32
    return %c0_i32, %c0_i32_0, %c0_i32_1 : i32, i32, i32
  }
  func.func @transform_5(%arg0: i32) -> (i32, i32, i32) {
    %c0_i32 = arith.constant 0 : i32
    %c0_i32_0 = arith.constant 0 : i32
    %c0_i32_1 = arith.constant 0 : i32
    %c0_i32_2 = arith.constant 0 : i32
    return %c0_i32, %c0_i32_0, %c0_i32_1 : i32, i32, i32
  }
  func.func @transform_6(%arg0: i32) -> (i32, i32) {
    %c0_i32 = arith.constant 0 : i32
    %c0_i32_0 = arith.constant 0 : i32
    %c0_i32_1 = arith.constant 0 : i32
    return %c0_i32, %c0_i32_0 : i32, i32
  }
  func.func @transform_7(%arg0: i32) -> (i32, i32) {
    %c0_i32 = arith.constant 0 : i32
    %c0_i32_0 = arith.constant 0 : i32
    %c0_i32_1 = arith.constant 0 : i32
    return %c0_i32, %c0_i32_0 : i32, i32
  }
  func.func @transform_8(%arg0: i32) -> (i32, i32) {
    %c0_i32 = arith.constant 0 : i32
    %c0_i32_0 = arith.constant 0 : i32
    %c0_i32_1 = arith.constant 0 : i32
    return %c0_i32, %c0_i32_0 : i32, i32
  }
  func.func @transform_9(%arg0: i32) -> (i32, i32) {
    %c0_i32 = arith.constant 0 : i32
    %c0_i32_0 = arith.constant 0 : i32
    %c0_i32_1 = arith.constant 0 : i32
    return %c0_i32, %c0_i32_0 : i32, i32
  }
  func.func @transform_10(%arg0: i32) -> (i32, i32) {
    %c0_i32 = arith.constant 0 : i32
    %c0_i32_0 = arith.constant 0 : i32
    %c0_i32_1 = arith.constant 0 : i32
    return %c0_i32, %c0_i32_0 : i32, i32
  }
}

</mosaic_0001>

<llo_original>
// kernel: mel_spec_decoder.1
$region0: #{mel_spec_decoder.1}
  #allocation0 [shape = 'u32[]', space=smem, size = 0x4, offset = 0x4, fixed_abs, tag = 'smem constant byte address 0x4 - core index']
  #allocation1 [shape = 'u32[144,128]{1,0:T(1,128)}', space=vmem, size = 0x12000, scoped, tag = 'internal scratch']
  %s0 = inlined_call_operand.vmem [shape: bf16[16,32], index: 0, kind: input, shape index: {}]
  %s1 = inlined_call_operand.vmem [shape: f32[16,1], index: 1, kind: input, shape index: {}]
  %s2 = inlined_call_operand.vmem [shape: bf16[32,32], index: 2, kind: input, shape index: {}]
  %s3 = inlined_call_operand.vmem [shape: f32[1,32], index: 3, kind: input, shape index: {}]
  %s4 = inlined_call_operand.vmem [shape: bf16[2,32,32], index: 4, kind: input, shape index: {}]
  %s5 = inlined_call_operand.vmem [shape: f32[2,1,32], index: 5, kind: input, shape index: {}]
  %s6 = inlined_call_operand.vmem [shape: bf16[32,32], index: 6, kind: input, shape index: {}]
  %s7 = inlined_call_operand.vmem [shape: f32[1,32], index: 7, kind: input, shape index: {}]
  %s8 = inlined_call_operand.vmem [shape: bf16[32,128], index: 8, kind: input, shape index: {}]
  %s9 = inlined_call_operand.vmem [shape: f32[1,128], index: 9, kind: input, shape index: {}]
  %s10 = inlined_call_operand.vmem [shape: f32[32,128], index: 10, kind: output, shape index: {}]
  %s11 = sld [smem:[#allocation0]]
  $region50: #{mel_spec_decoder.1} parent=0
    _
  %s13 = ssub.s32 1, %s11
  %s14 = scalar_select 0, %s13, %s11
  // Predicated region
  $region2: #{mel_spec_decoder.1} parent=0 // pred_check
    _
  $region3: #{mel_spec_decoder.1} parent=0 // pred_check_branch
    %16 = sbr.rel (0) target = $region5
  $region4: #{mel_spec_decoder.1} parent=0 // pred_region
    _
  $region5: #{mel_spec_decoder.1} parent=0 // pred_fallthru
    _
  // Predicated region
  $region6: #{mel_spec_decoder.1} parent=0 // pred_check
    _
  $region7: #{mel_spec_decoder.1} parent=0 // pred_check_branch
    %18 = sbr.rel (0) target = $region9
  $region8: #{mel_spec_decoder.1} parent=0 // pred_region
    _
  $region9: #{mel_spec_decoder.1} parent=0 // pred_fallthru
    _
  // Predicated region
  $region10: #{mel_spec_decoder.1} parent=0 // pred_check
    _
  $region11: #{mel_spec_decoder.1} parent=0 // pred_check_branch
    %20 = sbr.rel (0) target = $region13
  $region12: #{mel_spec_decoder.1} parent=0 // pred_region
    _
  $region13: #{mel_spec_decoder.1} parent=0 // pred_fallthru
    _
  // Predicated region
  $region14: #{mel_spec_decoder.1} parent=0 // pred_check
    _
  $region15: #{mel_spec_decoder.1} parent=0 // pred_check_branch
    %22 = sbr.rel (0) target = $region17
  $region16: #{mel_spec_decoder.1} parent=0 // pred_region
    _
  $region17: #{mel_spec_decoder.1} parent=0 // pred_fallthru
    _
  // Predicated region
  $region18: #{mel_spec_decoder.1} parent=0 // pred_check
    _
  $region19: #{mel_spec_decoder.1} parent=0 // pred_check_branch
    %24 = sbr.rel (0) target = $region21
  $region20: #{mel_spec_decoder.1} parent=0 // pred_region
    _
  $region21: #{mel_spec_decoder.1} parent=0 // pred_fallthru
    _
  // Predicated region
  $region22: #{mel_spec_decoder.1} parent=0 // pred_check
    _
  $region23: #{mel_spec_decoder.1} parent=0 // pred_check_branch
    %26 = sbr.rel (0) target = $region25
  $region24: #{mel_spec_decoder.1} parent=0 // pred_region
    _
  $region25: #{mel_spec_decoder.1} parent=0 // pred_fallthru
    _
  // Predicated region
  $region26: #{mel_spec_decoder.1} parent=0 // pred_check
    _
  $region27: #{mel_spec_decoder.1} parent=0 // pred_check_branch
    %28 = sbr.rel (0) target = $region29
  $region28: #{mel_spec_decoder.1} parent=0 // pred_region
    _
  $region29: #{mel_spec_decoder.1} parent=0 // pred_fallthru
    _
  // Predicated region
  $region30: #{mel_spec_decoder.1} parent=0 // pred_check
    _
  $region31: #{mel_spec_decoder.1} parent=0 // pred_check_branch
    %30 = sbr.rel (0) target = $region33
  $region32: #{mel_spec_decoder.1} parent=0 // pred_region
    _
  $region33: #{mel_spec_decoder.1} parent=0 // pred_fallthru
    _
  // Predicated region
  $region34: #{mel_spec_decoder.1} parent=0 // pred_check
    _
  $region35: #{mel_spec_decoder.1} parent=0 // pred_check_branch
    %32 = sbr.rel (0) target = $region37
  $region36: #{mel_spec_decoder.1} parent=0 // pred_region
    _
  $region37: #{mel_spec_decoder.1} parent=0 // pred_fallthru
    _
  // Predicated region
  $region38: #{mel_spec_decoder.1} parent=0 // pred_check
    _
  $region39: #{mel_spec_decoder.1} parent=0 // pred_check_branch
    %34 = sbr.rel (0) target = $region41
  $region40: #{mel_spec_decoder.1} parent=0 // pred_region
    _
  $region41: #{mel_spec_decoder.1} parent=0 // pred_fallthru
    _
  %v36 = vld [vmem:[%s0] sm:$0xf]
  %v37 = vld [vmem:[%s0 + $0x4] sm:$0xf]
  %v38 = vld [vmem:[%s1] sm:$0xff]
  %v39 = vld [vmem:[%s1 + $0x8] sm:$0xff]
  %v40 = vld [vmem:[%s2] sm:$0xf]
  %v41 = vld [vmem:[%s2 + $0x4] sm:$0xf]
  %v42 = vld [vmem:[%s2 + $0x8] sm:$0xf]
  %v43 = vld [vmem:[%s2 + $0xc] sm:$0xf]
  %v44 = vld [vmem:[%s3] sm:$0x1]
  %v46 = vlaneseq
  %v47 = vshrl.u32 %v46, 7
  %v48 = vsub.s32 0, %v47
  %v49 = vrot.slane %v44, %v48
  %v53 = vunpack.c.l.b16 %v36
  %v54 = vunpack.c.l.b16 %v37
  %v55 = vpack.c.b16 %v54, %v53
  %v60 = vunpack.c.l.b16 %v40
  %v61 = vunpack.c.l.b16 %v41
  %v62 = vunpack.c.l.b16 %v42
  %v63 = vunpack.c.l.b16 %v43
  %v64 = vpack.c.b16 %v61, %v60
  %v65 = vpack.c.b16 %v63, %v62
  %vm68 = vcmask 261120
  %v70 = vsel %vm68, %v55, 0
  %72 = vmatprep.subr.bf16.mxu0 0
  %73 = vmatpush1.bf16.msra.mxu0 %v64
  %74 = vmatprep.subr.bf16.mxu0 0
  %75 = vmatpush1.bf16.msra.mxu0 %v65
  %76 = vmatprep.subr.bf16.mxu0 0
  %77 = vmatpush1.bf16.msra.mxu0 0
  %78 = vmatprep.subr.bf16.mxu0 0
  %79 = vmatpush1.bf16.msra.mxu0 0
  %80 = vmatprep.subr.bf16.mxu0 0
  %81 = vmatpush1.bf16.msra.mxu0 0
  %82 = vmatprep.subr.bf16.mxu0 0
  %83 = vmatpush1.bf16.msra.mxu0 0
  %84 = vmatprep.subr.bf16.mxu0 0
  %85 = vmatpush1.bf16.msra.mxu0 0
  %86 = vmatprep.subr.bf16.mxu0 0
  %87 = vmatpush1.bf16.msra.mxu0 0
  %88 = vmatprep.subr.bf16.mxu0 0
  %89 = vmatpush1.bf16.msra.mxu0 0
  %90 = vmatprep.subr.bf16.mxu0 0
  %91 = vmatpush1.bf16.msra.mxu0 0
  %92 = vmatprep.subr.bf16.mxu0 0
  %93 = vmatpush1.bf16.msra.mxu0 0
  %94 = vmatprep.subr.bf16.mxu0 0
  %95 = vmatpush1.bf16.msra.mxu0 0
  %96 = vmatprep.subr.bf16.mxu0 0
  %97 = vmatpush1.bf16.msra.mxu0 0
  %98 = vmatprep.subr.bf16.mxu0 0
  %99 = vmatpush1.bf16.msra.mxu0 0
  %100 = vmatprep.subr.bf16.mxu0 0
  %101 = vmatpush1.bf16.msra.mxu0 0
  %102 = vmatprep.subr.bf16.mxu0 0
  %103 = vmatpush1.bf16.msra.mxu0 0
  %104 = vmatprep.mubr.bf16.mxu0 0
  %105 = vmatmul.mubr.bf16.gmra.mrb[0].mxu0 %v70
  %v106 = vpop.f32.mrb[0].mxu0
  %v107 = vadd.f32 %v49, %v106
  %v108 = vpop.f32.mrb[0].mxu0
  %v109 = vpop.f32.mrb[0].mxu0
  %v110 = vadd.f32 %v49, %v109
  %v111 = vpop.f32.mrb[0].mxu0
  %112 = vdwg.mxu0
  %v113 = vpack.c.bf16 %v110, %v107
  %v114 = vld [vmem:[%s4] sm:$0xf]
  %v115 = vld [vmem:[%s4 + $0x4] sm:$0xf]
  %v116 = vld [vmem:[%s4 + $0x8] sm:$0xf]
  %v117 = vld [vmem:[%s4 + $0xc] sm:$0xf]
  %v118 = vld [vmem:[%s5] sm:$0x1]
  %v120 = vlaneseq
  %v121 = vshrl.u32 %v120, 7
  %v122 = vsub.s32 0, %v121
  %v123 = vrot.slane %v118, %v122
  %v129 = vunpack.c.l.b16 %v114
  %v130 = vunpack.c.l.b16 %v115
  %v131 = vunpack.c.l.b16 %v116
  %v132 = vunpack.c.l.b16 %v117
  %v133 = vpack.c.b16 %v130, %v129
  %v134 = vpack.c.b16 %v132, %v131
  %v138 = vsel %vm68, %v113, 0
  %140 = vmatprep.subr.bf16.mxu0 0
  %141 = vmatpush1.bf16.msra.mxu0 %v133
  %142 = vmatprep.subr.bf16.mxu0 0
  %143 = vmatpush1.bf16.msra.mxu0 %v134
  %144 = vmatprep.subr.bf16.mxu0 0
  %145 = vmatpush1.bf16.msra.mxu0 0
  %146 = vmatprep.subr.bf16.mxu0 0
  %147 = vmatpush1.bf16.msra.mxu0 0
  %148 = vmatprep.subr.bf16.mxu0 0
  %149 = vmatpush1.bf16.msra.mxu0 0
  %150 = vmatprep.subr.bf16.mxu0 0
  %151 = vmatpush1.bf16.msra.mxu0 0
  %152 = vmatprep.subr.bf16.mxu0 0
  %153 = vmatpush1.bf16.msra.mxu0 0
  %154 = vmatprep.subr.bf16.mxu0 0
  %155 = vmatpush1.bf16.msra.mxu0 0
  %156 = vmatprep.subr.bf16.mxu0 0
  %157 = vmatpush1.bf16.msra.mxu0 0
  %158 = vmatprep.subr.bf16.mxu0 0
  %159 = vmatpush1.bf16.msra.mxu0 0
  %160 = vmatprep.subr.bf16.mxu0 0
  %161 = vmatpush1.bf16.msra.mxu0 0
  %162 = vmatprep.subr.bf16.mxu0 0
  %163 = vmatpush1.bf16.msra.mxu0 0
  %164 = vmatprep.subr.bf16.mxu0 0
  %165 = vmatpush1.bf16.msra.mxu0 0
  %166 = vmatprep.subr.bf16.mxu0 0
  %167 = vmatpush1.bf16.msra.mxu0 0
  %168 = vmatprep.subr.bf16.mxu0 0
  %169 = vmatpush1.bf16.msra.mxu0 0
  %170 = vmatprep.subr.bf16.mxu0 0
  %171 = vmatpush1.bf16.msra.mxu0 0
  %172 = vmatprep.mubr.bf16.mxu0 0
  %173 = vmatmul.mubr.bf16.gmra.mrb[0].mxu0 %v138
  %v174 = vpop.f32.mrb[0].mxu0
  %v175 = vadd.f32 %v123, %v174
  %v176 = vpop.f32.mrb[0].mxu0
  %v177 = vpop.f32.mrb[0].mxu0
  %v178 = vadd.f32 %v123, %v177
  %v179 = vpop.f32.mrb[0].mxu0
  %180 = vmatprep.mubr.bf16.mxu0 0
  %181 = vmatmul.mubr.bf16.gmra.mrb[0].mxu0 %v138
  %v182 = vpop.f32.mrb[0].mxu0
  %v183 = vadd.f32 %v123, %v182
  %v184 = vpop.f32.mrb[0].mxu0
  %v185 = vpop.f32.mrb[0].mxu0
  %v186 = vadd.f32 %v123, %v185
  %v187 = vpop.f32.mrb[0].mxu0
  %188 = vdwg.mxu0
  %v189 = vtanh.pop %v175
  %v190 = vtanh.pop %v178
  %v191 = vtanh.pop %v183
  %v192 = vtanh.pop %v186
  %v193 = vadd.f32 %v107, %v189
  %v194 = vadd.f32 %v110, %v190
  %v195 = vadd.f32 %v107, %v191
  %v196 = vadd.f32 %v110, %v192
  %v197 = vpack.c.bf16 %v194, %v193
  %v198 = vpack.c.bf16 %v196, %v195
  %s199 = scalar_lea.vmem %s4, 16
  %v200 = vld [vmem:[%s199] sm:$0xf]
  %v201 = vld [vmem:[%s199 + $0x4] sm:$0xf]
  %v202 = vld [vmem:[%s199 + $0x8] sm:$0xf]
  %v203 = vld [vmem:[%s199 + $0xc] sm:$0xf]
  %s204 = scalar_lea.vmem %s5, 1
  %v205 = vld [vmem:[%s204] sm:$0x1]
  %v207 = vlaneseq
  %v208 = vshrl.u32 %v207, 7
  %v209 = vsub.s32 0, %v208
  %v210 = vrot.slane %v205, %v209
  %v216 = vunpack.c.l.b16 %v200
  %v217 = vunpack.c.l.b16 %v201
  %v218 = vunpack.c.l.b16 %v202
  %v219 = vunpack.c.l.b16 %v203
  %v220 = vpack.c.b16 %v217, %v216
  %v221 = vpack.c.b16 %v219, %v218
  %v225 = vsel %vm68, %v197, 0
  %v228 = vsel %vm68, %v198, 0
  %230 = vmatprep.subr.bf16.mxu0 0
  %231 = vmatpush1.bf16.msra.mxu0 %v220
  %232 = vmatprep.subr.bf16.mxu0 0
  %233 = vmatpush1.bf16.msra.mxu0 %v221
  %234 = vmatprep.subr.bf16.mxu0 0
  %235 = vmatpush1.bf16.msra.mxu0 0
  %236 = vmatprep.subr.bf16.mxu0 0
  %237 = vmatpush1.bf16.msra.mxu0 0
  %238 = vmatprep.subr.bf16.mxu0 0
  %239 = vmatpush1.bf16.msra.mxu0 0
  %240 = vmatprep.subr.bf16.mxu0 0
  %241 = vmatpush1.bf16.msra.mxu0 0
  %242 = vmatprep.subr.bf16.mxu0 0
  %243 = vmatpush1.bf16.msra.mxu0 0
  %244 = vmatprep.subr.bf16.mxu0 0
  %245 = vmatpush1.bf16.msra.mxu0 0
  %246 = vmatprep.subr.bf16.mxu0 0
  %247 = vmatpush1.bf16.msra.mxu0 0
  %248 = vmatprep.subr.bf16.mxu0 0
  %249 = vmatpush1.bf16.msra.mxu0 0
  %250 = vmatprep.subr.bf16.mxu0 0
  %251 = vmatpush1.bf16.msra.mxu0 0
  %252 = vmatprep.subr.bf16.mxu0 0
  %253 = vmatpush1.bf16.msra.mxu0 0
  %254 = vmatprep.subr.bf16.mxu0 0
  %255 = vmatpush1.bf16.msra.mxu0 0
  %256 = vmatprep.subr.bf16.mxu0 0
  %257 = vmatpush1.bf16.msra.mxu0 0
  %258 = vmatprep.subr.bf16.mxu0 0
  %259 = vmatpush1.bf16.msra.mxu0 0
  %260 = vmatprep.subr.bf16.mxu0 0
  %261 = vmatpush1.bf16.msra.mxu0 0
  %262 = vmatprep.mubr.bf16.mxu0 0
  %263 = vmatmul.mubr.bf16.gmra.mrb[0].mxu0 %v225
  %v264 = vpop.f32.mrb[0].mxu0
  %v265 = vadd.f32 %v210, %v264
  %v266 = vpop.f32.mrb[0].mxu0
  %v267 = vpop.f32.mrb[0].mxu0
  %v268 = vadd.f32 %v210, %v267
  %v269 = vpop.f32.mrb[0].mxu0
  %270 = vmatprep.mubr.bf16.mxu0 0
  %271 = vmatmul.mubr.bf16.gmra.mrb[0].mxu0 %v228
  %v272 = vpop.f32.mrb[0].mxu0
  %v273 = vadd.f32 %v210, %v272
  %v274 = vpop.f32.mrb[0].mxu0
  %v275 = vpop.f32.mrb[0].mxu0
  %v276 = vadd.f32 %v210, %v275
  %v277 = vpop.f32.mrb[0].mxu0
  %278 = vdwg.mxu0
  %v279 = vtanh.pop %v265
  %v280 = vtanh.pop %v268
  %v281 = vtanh.pop %v273
  %v282 = vtanh.pop %v276
  %v283 = vadd.f32 %v193, %v279
  %v284 = vadd.f32 %v194, %v280
  %v285 = vadd.f32 %v195, %v281
  %v286 = vadd.f32 %v196, %v282
  %v287 = vpack.c.bf16 %v284, %v283
  %v288 = vpack.c.bf16 %v286, %v285
  %v289 = vld [vmem:[%s6] sm:$0xf]
  %v290 = vld [vmem:[%s6 + $0x4] sm:$0xf]
  %v291 = vld [vmem:[%s6 + $0x8] sm:$0xf]
  %v292 = vld [vmem:[%s6 + $0xc] sm:$0xf]
  %v293 = vld [vmem:[%s7] sm:$0x1]
  %v295 = vlaneseq
  %v296 = vshrl.u32 %v295, 7
  %v297 = vsub.s32 0, %v296
  %v298 = vrot.slane %v293, %v297
  %v304 = vunpack.c.l.b16 %v289
  %v305 = vunpack.c.l.b16 %v290
  %v306 = vunpack.c.l.b16 %v291
  %v307 = vunpack.c.l.b16 %v292
  %v308 = vpack.c.b16 %v305, %v304
  %v309 = vpack.c.b16 %v307, %v306
  %v313 = vsel %vm68, %v287, 0
  %v316 = vsel %vm68, %v288, 0
  %318 = vmatprep.subr.bf16.mxu0 0
  %319 = vmatpush1.bf16.msra.mxu0 %v308
  %320 = vmatprep.subr.bf16.mxu0 0
  %321 = vmatpush1.bf16.msra.mxu0 %v309
  %322 = vmatprep.subr.bf16.mxu0 0
  %323 = vmatpush1.bf16.msra.mxu0 0
  %324 = vmatprep.subr.bf16.mxu0 0
  %325 = vmatpush1.bf16.msra.mxu0 0
  %326 = vmatprep.subr.bf16.mxu0 0
  %327 = vmatpush1.bf16.msra.mxu0 0
  %328 = vmatprep.subr.bf16.mxu0 0
  %329 = vmatpush1.bf16.msra.mxu0 0
  %330 = vmatprep.subr.bf16.mxu0 0
  %331 = vmatpush1.bf16.msra.mxu0 0
  %332 = vmatprep.subr.bf16.mxu0 0
  %333 = vmatpush1.bf16.msra.mxu0 0
  %334 = vmatprep.subr.bf16.mxu0 0
  %335 = vmatpush1.bf16.msra.mxu0 0
  %336 = vmatprep.subr.bf16.mxu0 0
  %337 = vmatpush1.bf16.msra.mxu0 0
  %338 = vmatprep.subr.bf16.mxu0 0
  %339 = vmatpush1.bf16.msra.mxu0 0
  %340 = vmatprep.subr.bf16.mxu0 0
  %341 = vmatpush1.bf16.msra.mxu0 0
  %342 = vmatprep.subr.bf16.mxu0 0
  %343 = vmatpush1.bf16.msra.mxu0 0
  %344 = vmatprep.subr.bf16.mxu0 0
  %345 = vmatpush1.bf16.msra.mxu0 0
  %346 = vmatprep.subr.bf16.mxu0 0
  %347 = vmatpush1.bf16.msra.mxu0 0
  %348 = vmatprep.subr.bf16.mxu0 0
  %349 = vmatpush1.bf16.msra.mxu0 0
  %350 = vmatprep.mubr.bf16.mxu0 0
  %351 = vmatmul.mubr.bf16.gmra.mrb[0].mxu0 %v313
  %v352 = vpop.f32.mrb[0].mxu0
  %v353 = vadd.f32 %v298, %v352
  %v354 = vpop.f32.mrb[0].mxu0
  %v355 = vpop.f32.mrb[0].mxu0
  %v356 = vadd.f32 %v298, %v355
  %v357 = vpop.f32.mrb[0].mxu0
  %358 = vmatprep.mubr.bf16.mxu0 0
  %359 = vmatmul.mubr.bf16.gmra.mrb[0].mxu0 %v316
  %v360 = vpop.f32.mrb[0].mxu0
  %v361 = vadd.f32 %v298, %v360
  %v362 = vpop.f32.mrb[0].mxu0
  %v363 = vpop.f32.mrb[0].mxu0
  %v364 = vadd.f32 %v298, %v363
  %v365 = vpop.f32.mrb[0].mxu0
  %366 = vdwg.mxu0
  %v367 = vpack.c.bf16 %v356, %v353
  %v368 = vpack.c.bf16 %v364, %v361
  %v369 = vld [vmem:[%s8] sm:$0xf]
  %v370 = vld [vmem:[%s8 + $0x4] sm:$0xf]
  %v371 = vld [vmem:[%s8 + $0x8] sm:$0xf]
  %v372 = vld [vmem:[%s8 + $0xc] sm:$0xf]
  %v373 = vld [vmem:[%s9] sm:$0x1]
  %v375 = vlaneseq
  %v376 = vshrl.u32 %v375, 7
  %v377 = vsub.s32 0, %v376
  %v378 = vrot.slane %v373, %v377
  %v384 = vunpack.c.l.b16 %v369
  %v385 = vunpack.c.l.b16 %v370
  %v386 = vunpack.c.l.b16 %v371
  %v387 = vunpack.c.l.b16 %v372
  %v388 = vpack.c.b16 %v385, %v384
  %v389 = vpack.c.b16 %v387, %v386
  %v393 = vsel %vm68, %v367, 0
  %v396 = vsel %vm68, %v368, 0
  %398 = vmatprep.subr.bf16.mxu0 0
  %399 = vmatpush1.bf16.msra.mxu0 %v388
  %400 = vmatprep.subr.bf16.mxu0 0
  %401 = vmatpush1.bf16.msra.mxu0 %v389
  %402 = vmatprep.subr.bf16.mxu0 0
  %403 = vmatpush1.bf16.msra.mxu0 0
  %404 = vmatprep.subr.bf16.mxu0 0
  %405 = vmatpush1.bf16.msra.mxu0 0
  %406 = vmatprep.subr.bf16.mxu0 0
  %407 = vmatpush1.bf16.msra.mxu0 0
  %408 = vmatprep.subr.bf16.mxu0 0
  %409 = vmatpush1.bf16.msra.mxu0 0
  %410 = vmatprep.subr.bf16.mxu0 0
  %411 = vmatpush1.bf16.msra.mxu0 0
  %412 = vmatprep.subr.bf16.mxu0 0
  %413 = vmatpush1.bf16.msra.mxu0 0
  %414 = vmatprep.subr.bf16.mxu0 0
  %415 = vmatpush1.bf16.msra.mxu0 0
  %416 = vmatprep.subr.bf16.mxu0 0
  %417 = vmatpush1.bf16.msra.mxu0 0
  %418 = vmatprep.subr.bf16.mxu0 0
  %419 = vmatpush1.bf16.msra.mxu0 0
  %420 = vmatprep.subr.bf16.mxu0 0
  %421 = vmatpush1.bf16.msra.mxu0 0
  %422 = vmatprep.subr.bf16.mxu0 0
  %423 = vmatpush1.bf16.msra.mxu0 0
  %424 = vmatprep.subr.bf16.mxu0 0
  %425 = vmatpush1.bf16.msra.mxu0 0
  %426 = vmatprep.subr.bf16.mxu0 0
  %427 = vmatpush1.bf16.msra.mxu0 0
  %428 = vmatprep.subr.bf16.mxu0 0
  %429 = vmatpush1.bf16.msra.mxu0 0
  %430 = vmatprep.mubr.bf16.mxu0 0
  %431 = vmatmul.mubr.bf16.gmra.mrb[0].mxu0 %v393
  %v432 = vpop.f32.mrb[0].mxu0
  %v433 = vadd.f32 %v378, %v432
  %v434 = vpop.f32.mrb[0].mxu0
  %v435 = vpop.f32.mrb[0].mxu0
  %v436 = vadd.f32 %v378, %v435
  %v437 = vpop.f32.mrb[0].mxu0
  %438 = vmatprep.mubr.bf16.mxu0 0
  %439 = vmatmul.mubr.bf16.gmra.mrb[0].mxu0 %v396
  %v440 = vpop.f32.mrb[0].mxu0
  %v441 = vadd.f32 %v378, %v440
  %v442 = vpop.f32.mrb[0].mxu0
  %v443 = vpop.f32.mrb[0].mxu0
  %v444 = vadd.f32 %v378, %v443
  %v445 = vpop.f32.mrb[0].mxu0
  %446 = vdwg.mxu0
  %448 = vset.pattern.permute.xlu0 0
  %449 = vperm.xlu0 %448, %v38
  %v450 = vpop.permute.xlu0 %449
  %453 = vset.pattern.permute.xlu0 0
  %454 = vperm.xlu0 %453, %v39
  %v455 = vpop.permute.xlu0 %454
  %v457 = vmul.f32 %v433, %v450
  %v458 = vmul.f32 %v436, %v455
  %v459 = vmul.f32 %v441, %v450
  %v460 = vmul.f32 %v444, %v455
  %461 = vst [vmem:[%s10] sm:$0xff] %v457
  %462 = vst [vmem:[%s10 + $0x8] sm:$0xff] %v458
  %463 = vst [vmem:[%s10 + $0x10] sm:$0xff] %v459
  %464 = vst [vmem:[%s10 + $0x18] sm:$0xff] %v460
  // Predicated region
  $region42: #{mel_spec_decoder.1} parent=0 // pred_check
    _
  $region43: #{mel_spec_decoder.1} parent=0 // pred_check_branch
    %466 = sbr.rel (0) target = $region45
  $region44: #{mel_spec_decoder.1} parent=0 // pred_region
    _
  $region45: #{mel_spec_decoder.1} parent=0 // pred_fallthru
    _
  // Predicated region
  $region46: #{mel_spec_decoder.1} parent=0 // pred_check
    _
  $region47: #{mel_spec_decoder.1} parent=0 // pred_check_branch
    %468 = sbr.rel (0) target = $region49
  $region48: #{mel_spec_decoder.1} parent=0 // pred_region
    _
  $region49: #{mel_spec_decoder.1} parent=0 // pred_fallthru
    _

</llo_original>
